<compile_context>
chip_gen: v7x
topology: tpu7x:2x2x1
jax: 0.10.0
libtpu: 0.0.40
codegen_flags: <defaults>
</compile_context>

<pallas_src>
import functools

import numpy as np
import jax
import jax.numpy as jnp
from jax.experimental import pallas as pl
from jax.experimental.pallas import tpu as pltpu

EPS = 1e-5  # default eps of BatchNorm1d / GroupNorm / LayerNorm

# --- VMEM budget / block sizing -------------------------------------------
try:
    _VMEM_PHYS = int(pltpu.get_tpu_info().vmem_capacity_bytes)
except Exception:  # pragma: no cover - conservative fallback (v7x-sized)
    _VMEM_PHYS = 64 * 1024 * 1024
_VMEM_LIMIT = min((_VMEM_PHYS * 3) // 4, 96 * 1024 * 1024)
_DEFAULT_BLOCK_BYTES = max(2 * 1024 * 1024, min(8 * 1024 * 1024, _VMEM_LIMIT // 8))


def _cparams(semantics, block_bytes):
    """CompilerParams with an explicit scoped-VMEM limit sized for the blocks."""
    limit = max(_VMEM_LIMIT, 6 * block_bytes + (2 << 20))
    limit = min(limit, (_VMEM_PHYS * 9) // 10)
    return pltpu.CompilerParams(dimension_semantics=semantics,
                                vmem_limit_bytes=int(limit))


# --- Tile-size helpers ------------------------------------------------------
def _lane_tiles(T):
    """Legal T tiles (multiples of 128 dividing T, or the full extent), desc."""
    if T % 128 != 0:
        return [T]
    return sorted({d for d in range(128, T + 1, 128) if T % d == 0}, reverse=True)


def _sublane_tiles(C):
    """Legal C tiles (multiples of 8 dividing C, plus C itself), descending."""
    cands = {C}
    d = 8
    while d < C:
        if C % d == 0:
            cands.add(d)
        d += 8
    return sorted(cands, reverse=True)


def _choose_block(C, T, budget_bytes, *, require_full_c=False, elem_bytes=4):
    """Largest legal (c_tile, t_tile) block under the f32 byte budget."""
    t_opts = _lane_tiles(T)
    c_opts = [C] if require_full_c else _sublane_tiles(C)
    best = None
    for t in t_opts:
        for c in c_opts:
            if c * t * elem_bytes <= budget_bytes:
                score = (c * t, t)
                if best is None or score > best[0]:
                    best = (score, (c, t))
                break  # c_opts is descending: first fit is the largest for this t
    if best is not None:
        return best[1]
    # Nothing fits the budget (e.g. odd T with full-C requirement): take the
    # smallest legal block and rely on the explicit vmem_limit.
    return (c_opts[-1], t_opts[-1])


def _group_matrices(gb, cg):
    """0/1 pooling (gb, gb*cg) and broadcast (gb*cg, gb) matrices for GN."""
    lg = np.arange(gb * cg) // cg
    pool = (lg[None, :] == np.arange(gb)[:, None]).astype(np.float32)
    return jnp.asarray(pool), jnp.asarray(pool.T)


# --- Kernels ----------------------------------------------------------------
def _bn_stats_kernel(x_ref, g_ref, b_ref, scale_ref, shift_ref, s_scr, s2_scr,
                     *, eps, inv_count):
    """BN pass 1: per-channel sum / sumsq over (B, T); finalize scale/shift.

    grid = (n_c ["parallel"], B, n_t); x_ref: (1, c_tile, t_tile);
    scale/shift: (1, c_tile, 1) written only on the last (B, T) step.
    """
    b = pl.program_id(1)
    t = pl.program_id(2)

    @pl.when((b == 0) & (t == 0))
    def _():
        s_scr[...] = jnp.zeros_like(s_scr)
        s2_scr[...] = jnp.zeros_like(s2_scr)

    x = x_ref[0].astype(jnp.float32)                       # (c_tile, t_tile)
    s_scr[...] += jnp.sum(x, axis=-1, keepdims=True)
    s2_scr[...] += jnp.sum(x * x, axis=-1, keepdims=True)

    @pl.when((b == pl.num_programs(1) - 1) & (t == pl.num_programs(2) - 1))
    def _():
        mean = s_scr[...] * inv_count
        var = s2_scr[...] * inv_count - mean * mean        # biased variance
        inv = jax.lax.rsqrt(var + eps)
        scale = g_ref[...].astype(jnp.float32) * inv
        scale_ref[0] = scale
        shift_ref[0] = b_ref[...].astype(jnp.float32) - mean * scale


def _scale_shift_kernel(x_ref, scale_ref, shift_ref, o_ref):
    """y = x * scale + shift with per-(batch?, channel) scale/shift."""
    x = x_ref[0].astype(jnp.float32)                       # (c_tile, t_tile)
    y = x * scale_ref[0] + shift_ref[0]                    # (c_tile, 1) bcast
    o_ref[0] = y.astype(o_ref.dtype)


def _layer_norm_kernel(x_ref, g_ref, b_ref, o_ref, *, eps):
    """LayerNorm over C in native (B, C, T) layout; lane-dense on T."""
    x = x_ref[0].astype(jnp.float32)                       # (C, t_tile)
    mean = jnp.mean(x, axis=0, keepdims=True)              # (1, t_tile)
    xc = x - mean
    var = jnp.mean(xc * xc, axis=0, keepdims=True)
    inv = jax.lax.rsqrt(var + eps)
    y = xc * inv * g_ref[...].astype(jnp.float32) + b_ref[...].astype(jnp.float32)
    o_ref[0] = y.astype(o_ref.dtype)


def _group_norm_kernel(x_ref, g_ref, b_ref, pool_ref, bcast_ref, o_ref, *,
                       eps, inv_n):
    """Single-pass GroupNorm on a (c_tile = gb*Cg, T) lane-dense block.

    Per-channel lane reductions feed two tiny 0/1 matmuls (MXU) that pool to
    per-group stats and broadcast them back to per-channel column vectors.
    """
    x = x_ref[0].astype(jnp.float32)                       # (c_tile, T)
    ch_s = jnp.sum(x, axis=-1, keepdims=True)              # (c_tile, 1)
    mean_g = jnp.dot(pool_ref[...], ch_s,
                     preferred_element_type=jnp.float32) * inv_n      # (gb, 1)
    mean_c = jnp.dot(bcast_ref[...], mean_g,
                     preferred_element_type=jnp.float32)              # (c_tile, 1)
    xc = x - mean_c
    ch_v = jnp.sum(xc * xc, axis=-1, keepdims=True)
    var_g = jnp.dot(pool_ref[...], ch_v,
                    preferred_element_type=jnp.float32) * inv_n
    inv_c = jnp.dot(bcast_ref[...], jax.lax.rsqrt(var_g + eps),
                    preferred_element_type=jnp.float32)
    y = xc * inv_c * g_ref[...] + b_ref[...]
    o_ref[0] = y.astype(o_ref.dtype)


def _gn_stats_kernel(x_ref, g_ref, b_ref, pool_ref, bcast_ref,
                     scale_ref, shift_ref, s_scr, s2_scr, *, eps, inv_count):
    """GN fallback pass 1 (group too big for one block): T-tiled stats.

    grid = (B, n_g, n_t); accumulates per-channel sums over t, finalizes
    per-(batch, channel) scale/shift at the last T tile.
    """
    t = pl.program_id(2)

    @pl.when(t == 0)
    def _():
        s_scr[...] = jnp.zeros_like(s_scr)
        s2_scr[...] = jnp.zeros_like(s2_scr)

    x = x_ref[0].astype(jnp.float32)                       # (c_tile, t_tile)
    s_scr[...] += jnp.sum(x, axis=-1, keepdims=True)
    s2_scr[...] += jnp.sum(x * x, axis=-1, keepdims=True)

    @pl.when(t == pl.num_programs(2) - 1)
    def _():
        g_s = jnp.dot(pool_ref[...], s_scr[...], preferred_element_type=jnp.float32)
        g_s2 = jnp.dot(pool_ref[...], s2_scr[...], preferred_element_type=jnp.float32)
        mean_g = g_s * inv_count
        var_g = g_s2 * inv_count - mean_g * mean_g
        inv_g = jax.lax.rsqrt(var_g + eps)
        mean_c = jnp.dot(bcast_ref[...], mean_g, preferred_element_type=jnp.float32)
        inv_c = jnp.dot(bcast_ref[...], inv_g, preferred_element_type=jnp.float32)
        scale = g_ref[...].astype(jnp.float32) * inv_c
        scale_ref[0] = scale
        shift_ref[0] = b_ref[...].astype(jnp.float32) - mean_c * scale


# --- Wrappers ---------------------------------------------------------------
def _apply_scale_shift(x, scale, shift, block_bytes):
    """y[b,c,t] = x[b,c,t] * scale[bp,c,0] + shift[bp,c,0] (bp = 0 or b)."""
    B, C, T = x.shape
    Bp = scale.shape[0]
    c_tile, t_tile = _choose_block(C, T, block_bytes)
    n_c, n_t = C // c_tile, T // t_tile
    if Bp == 1:
        p_map = lambda b, c, t: (0, c, 0)
    else:
        p_map = lambda b, c, t: (b, c, 0)
    return pl.pallas_call(
        _scale_shift_kernel,
        grid=(B, n_c, n_t),
        in_specs=[
            pl.BlockSpec((1, c_tile, t_tile), lambda b, c, t: (b, c, t)),
            pl.BlockSpec((1, c_tile, 1), p_map),
            pl.BlockSpec((1, c_tile, 1), p_map),
        ],
        out_specs=pl.BlockSpec((1, c_tile, t_tile), lambda b, c, t: (b, c, t)),
        out_shape=jax.ShapeDtypeStruct((B, C, T), x.dtype),
        compiler_params=_cparams(("parallel", "parallel", "parallel"),
                                 c_tile * t_tile * 4),
    )(x, scale, shift)


def batch_norm_1d(x, gamma, beta, eps=EPS, block_bytes=_DEFAULT_BLOCK_BYTES):
    """nn.BatchNorm1d forward (training mode: batch statistics). x: (B, C, T)."""
    B, C, T = x.shape
    c_tile, t_tile = _choose_block(C, T, block_bytes)
    n_c, n_t = C // c_tile, T // t_tile
    g2 = gamma.reshape(C, 1).astype(jnp.float32)
    b2 = beta.reshape(C, 1).astype(jnp.float32)

    # Pass 1: per-channel stats, channel axis "parallel" (megacore), the affine
    # is folded into per-channel scale/shift inside the kernel's finalize step.
    scale, shift = pl.pallas_call(
        functools.partial(_bn_stats_kernel, eps=eps, inv_count=1.0 / (B * T)),
        grid=(n_c, B, n_t),
        in_specs=[
            pl.BlockSpec((1, c_tile, t_tile), lambda c, b, t: (b, c, t)),
            pl.BlockSpec((c_tile, 1), lambda c, b, t: (c, 0)),
            pl.BlockSpec((c_tile, 1), lambda c, b, t: (c, 0)),
        ],
        out_specs=(
            pl.BlockSpec((1, c_tile, 1), lambda c, b, t: (0, c, 0)),
            pl.BlockSpec((1, c_tile, 1), lambda c, b, t: (0, c, 0)),
        ),
        out_shape=(
            jax.ShapeDtypeStruct((1, C, 1), jnp.float32),
            jax.ShapeDtypeStruct((1, C, 1), jnp.float32),
        ),
        scratch_shapes=[pltpu.VMEM((c_tile, 1), jnp.float32),
                        pltpu.VMEM((c_tile, 1), jnp.float32)],
        compiler_params=_cparams(("parallel", "arbitrary", "arbitrary"),
                                 c_tile * t_tile * 4),
    )(x, g2, b2)

    # TODO(synk): running_mean / running_var buffer updates (training-time side
    # effect of nn.BatchNorm1d) and eval-mode (running-stat) BN are not handled.
    return _apply_scale_shift(x, scale, shift, block_bytes)


def layer_norm_ct(x, gamma, beta, eps=EPS, block_bytes=_DEFAULT_BLOCK_BYTES):
    """Rearrange('b c t -> b t c') -> nn.LayerNorm(C) -> back, computed in the
    native (B, C, T) layout (reduction over C inside the kernel)."""
    B, C, T = x.shape
    _, t_tile = _choose_block(C, T, block_bytes, require_full_c=True)
    n_t = T // t_tile
    # TODO(synk): for very large T not divisible by 128 a pad-to-128 path would
    # restore T tiling/pipelining; currently we fall back to a full-T block.
    return pl.pallas_call(
        functools.partial(_layer_norm_kernel, eps=eps),
        grid=(B, n_t),
        in_specs=[
            pl.BlockSpec((1, C, t_tile), lambda b, t: (b, 0, t)),
            pl.BlockSpec((C, 1), lambda b, t: (0, 0)),
            pl.BlockSpec((C, 1), lambda b, t: (0, 0)),
        ],
        out_specs=pl.BlockSpec((1, C, t_tile), lambda b, t: (b, 0, t)),
        out_shape=jax.ShapeDtypeStruct((B, C, T), x.dtype),
        compiler_params=_cparams(("parallel", "parallel"), C * t_tile * 4),
    )(x, gamma.reshape(C, 1).astype(jnp.float32),
      beta.reshape(C, 1).astype(jnp.float32))


def group_norm(x, gamma, beta, num_groups, eps=EPS,
               block_bytes=_DEFAULT_BLOCK_BYTES):
    """nn.GroupNorm(num_groups, num_channels=C). x: (B, C, T)."""
    B, C, T = x.shape
    G = num_groups
    assert C % G == 0
    Cg = C // G
    g2 = gamma.reshape(C, 1).astype(jnp.float32)
    b2 = beta.reshape(C, 1).astype(jnp.float32)

    # Channel tiles must cover whole groups and be sublane aligned (multiple
    # of 8) unless they span all of C.
    legal_gb = [gb for gb in range(1, G + 1)
                if G % gb == 0 and ((gb * Cg) % 8 == 0 or gb * Cg == C)]

    single_group_bytes = Cg * T * 4
    fits_single = [gb for gb in legal_gb if gb * Cg * T * 4 <= block_bytes]

    if fits_single or T % 128 != 0 or single_group_bytes <= block_bytes:
        # ---- single pass: whole groups (full T) per block, 1 read + 1 write.
        gb = max(fits_single) if fits_single else min(legal_gb)
        c_tile = gb * Cg
        pool, bcast = _group_matrices(gb, Cg)
        n_g = G // gb
        return pl.pallas_call(
            functools.partial(_group_norm_kernel, eps=eps, inv_n=1.0 / (Cg * T)),
            grid=(B, n_g),
            in_specs=[
                pl.BlockSpec((1, c_tile, T), lambda b, g: (b, g, 0)),
                pl.BlockSpec((c_tile, 1), lambda b, g: (g, 0)),
                pl.BlockSpec((c_tile, 1), lambda b, g: (g, 0)),
                pl.BlockSpec((gb, c_tile), lambda b, g: (0, 0)),
                pl.BlockSpec((c_tile, gb), lambda b, g: (0, 0)),
            ],
            out_specs=pl.BlockSpec((1, c_tile, T), lambda b, g: (b, g, 0)),
            out_shape=jax.ShapeDtypeStruct((B, C, T), x.dtype),
            compiler_params=_cparams(("parallel", "parallel"), c_tile * T * 4),
        )(x, g2, b2, pool, bcast)

    # ---- two-pass fallback: a single group does not fit the block budget ----
    fits_stats = [gb for gb in legal_gb if gb * Cg * 128 * 4 <= block_bytes]
    gb = max(fits_stats) if fits_stats else min(legal_gb)
    c_tile = gb * Cg
    t_opts = _lane_tiles(T)
    t_tile = next((t for t in t_opts if c_tile * t * 4 <= block_bytes), t_opts[-1])
    pool, bcast = _group_matrices(gb, Cg)
    n_g, n_t = G // gb, T // t_tile
    scale, shift = pl.pallas_call(
        functools.partial(_gn_stats_kernel, eps=eps, inv_count=1.0 / (Cg * T)),
        grid=(B, n_g, n_t),
        in_specs=[
            pl.BlockSpec((1, c_tile, t_tile), lambda b, g, t: (b, g, t)),
            pl.BlockSpec((c_tile, 1), lambda b, g, t: (g, 0)),
            pl.BlockSpec((c_tile, 1), lambda b, g, t: (g, 0)),
            pl.BlockSpec((gb, c_tile), lambda b, g, t: (0, 0)),
            pl.BlockSpec((c_tile, gb), lambda b, g, t: (0, 0)),
        ],
        out_specs=(
            pl.BlockSpec((1, c_tile, 1), lambda b, g, t: (b, g, 0)),
            pl.BlockSpec((1, c_tile, 1), lambda b, g, t: (b, g, 0)),
        ),
        out_shape=(
            jax.ShapeDtypeStruct((B, C, 1), jnp.float32),
            jax.ShapeDtypeStruct((B, C, 1), jnp.float32),
        ),
        scratch_shapes=[pltpu.VMEM((c_tile, 1), jnp.float32),
                        pltpu.VMEM((c_tile, 1), jnp.float32)],
        compiler_params=_cparams(("parallel", "parallel", "arbitrary"),
                                 c_tile * t_tile * 4),
    )(x, g2, b2, pool, bcast)
    return _apply_scale_shift(x, scale, shift, block_bytes)


class NormModule:
    """JAX/Pallas equivalent of opentad NormModule (forward only)."""

    def __init__(self, norm_type, norm_dim, key, num_groups=None):
        assert norm_type in ("BN", "GN", "LN")
        self.norm_type = norm_type
        self.num_groups = num_groups
        kg, kb = jax.random.split(key)
        # PyTorch default init is ones/zeros; random values exercise the affine.
        self.gamma = 1.0 + 0.1 * jax.random.normal(kg, (norm_dim,), jnp.float32)
        self.beta = 0.1 * jax.random.normal(kb, (norm_dim,), jnp.float32)

    def __call__(self, x):
        if self.norm_type == "BN":
            return batch_norm_1d(x, self.gamma, self.beta)
        if self.norm_type == "LN":
            return layer_norm_ct(x, self.gamma, self.beta)
        return group_norm(x, self.gamma, self.beta, self.num_groups)


# --- Pure-JAX references (correctness check) --------------------------------
def _ref_bn(x, g, b, eps=EPS):
    mean = jnp.mean(x, axis=(0, 2), keepdims=True)
    var = jnp.mean((x - mean) ** 2, axis=(0, 2), keepdims=True)
    return (x - mean) / jnp.sqrt(var + eps) * g[None, :, None] + b[None, :, None]


def _ref_ln(x, g, b, eps=EPS):
    mean = jnp.mean(x, axis=1, keepdims=True)
    var = jnp.mean((x - mean) ** 2, axis=1, keepdims=True)
    return (x - mean) / jnp.sqrt(var + eps) * g[None, :, None] + b[None, :, None]


def _ref_gn(x, g, b, G, eps=EPS):
    B, C, T = x.shape
    xg = x.reshape(B, G, -1)
    mean = jnp.mean(xg, axis=-1, keepdims=True)
    var = jnp.mean((xg - mean) ** 2, axis=-1, keepdims=True)
    xn = ((xg - mean) / jnp.sqrt(var + eps)).reshape(B, C, T)
    return xn * g[None, :, None] + b[None, :, None]


if __name__ == "__main__":
    key = jax.random.PRNGKey(0)
    kx, kp, kx2, kp2 = jax.random.split(key, 4)

    # --- Test 1: tiny shapes through the NormModule API (single-block grids) --
    B, C, T = 2, 8, 16
    num_groups = 2
    x = jax.random.normal(kx, (B, C, T), jnp.float32)

    bn = NormModule("BN", C, kp)
    ln = NormModule("LN", C, kp)
    gn = NormModule("GN", C, kp, num_groups=num_groups)

    y_bn = jax.block_until_ready(bn(x))
    y_ln = jax.block_until_ready(ln(x))
    y_gn = jax.block_until_ready(gn(x))

    assert jnp.allclose(y_bn, _ref_bn(x, bn.gamma, bn.beta), atol=1e-4), "BN mismatch"
    assert jnp.allclose(y_ln, _ref_ln(x, ln.gamma, ln.beta), atol=1e-4), "LN mismatch"
    assert jnp.allclose(y_gn, _ref_gn(x, gn.gamma, gn.beta, num_groups), atol=1e-4), "GN mismatch"
    assert y_bn.shape == y_ln.shape == y_gn.shape == (B, C, T)

    # --- Test 2: tiny block budget forces C/T tiling, cross-tile BN
    #             accumulation, and the multi-group single-pass GN path. ------
    B2, C2, T2 = 2, 16, 256
    x2 = jax.random.normal(kx2, (B2, C2, T2), jnp.float32) * 2.0 + 0.5
    kg2, kb2 = jax.random.split(kp2)
    g2 = 1.0 + 0.1 * jax.random.normal(kg2, (C2,), jnp.float32)
    b2 = 0.1 * jax.random.normal(kb2, (C2,), jnp.float32)
    budget = 8 * 128 * 4  # -> (8, 128) blocks

    y2_bn = jax.block_until_ready(batch_norm_1d(x2, g2, b2, block_bytes=budget))
    y2_ln = jax.block_until_ready(layer_norm_ct(x2, g2, b2, block_bytes=budget))
    y2_gn = jax.block_until_ready(group_norm(x2, g2, b2, 4, block_bytes=budget))

    assert jnp.allclose(y2_bn, _ref_bn(x2, g2, b2), atol=1e-4), "BN tiled mismatch"
    assert jnp.allclose(y2_ln, _ref_ln(x2, g2, b2), atol=1e-4), "LN tiled mismatch"
    assert jnp.allclose(y2_gn, _ref_gn(x2, g2, b2, 4), atol=1e-4), "GN tiled mismatch"

    # --- Test 3: GN two-pass fallback (single group > block budget). ---------
    y3_gn = jax.block_until_ready(group_norm(x2, g2, b2, 2, block_bytes=budget))
    assert jnp.allclose(y3_gn, _ref_gn(x2, g2, b2, 2), atol=1e-4), "GN two-pass mismatch"

    print("KERNEL_OK")
</pallas_src>

<mosaic_0001>
module attributes {stable_mosaic.version = 11 : i64} {
  func.func @_bn_stats_kernel(%arg0: i32, %arg1: i32, %arg2: i32, %arg3: memref<1x8x16xf32, #tpu.memory_space<vmem>>, %arg4: memref<8x1xf32, #tpu.memory_space<vmem>>, %arg5: memref<8x1xf32, #tpu.memory_space<vmem>>, %arg6: memref<1x8x1xf32, #tpu.memory_space<vmem>>, %arg7: memref<1x8x1xf32, #tpu.memory_space<vmem>>, %arg8: memref<8x1xf32, #tpu.memory_space<vmem>>, %arg9: memref<8x1xf32, #tpu.memory_space<vmem>>) attributes {dimension_semantics = [#tpu.dimension_semantics<parallel>, #tpu.dimension_semantics<arbitrary>, #tpu.dimension_semantics<arbitrary>], iteration_bounds = array<i64: 1, 2, 1>, scalar_prefetch = 0 : i64, scratch_operands = 2 : i64, tpu.core_type = #tpu.core_type<tc>, window_params = [{transform_indices = @transform_0, window_bounds = array<i64: 1, 8, 16>}, {transform_indices = @transform_1, window_bounds = array<i64: 8, 1>}, {transform_indices = @transform_2, window_bounds = array<i64: 8, 1>}, {transform_indices = @transform_3, window_bounds = array<i64: 1, 8, 1>}, {transform_indices = @transform_4, window_bounds = array<i64: 1, 8, 1>}]} {
    %c0_i32 = arith.constant 0 : i32
    %0 = arith.cmpi eq, %arg1, %c0_i32 : i32
    %c0_i32_0 = arith.constant 0 : i32
    %1 = arith.cmpi eq, %arg2, %c0_i32_0 : i32
    %2 = arith.andi %0, %1 : i1
    %3 = arith.extui %2 : i1 to i32
    %c0_i32_1 = arith.constant 0 : i32
    %4 = arith.cmpi ne, %3, %c0_i32_1 : i32
    scf.if %4 {
      %cst_15 = arith.constant 0.000000e+00 : f32
      %23 = vector.broadcast %cst_15 : f32 to vector<8x1xf32>
      %c0_16 = arith.constant 0 : index
      %c0_17 = arith.constant 0 : index
      %24 = vector.load %arg8[%c0_16, %c0_17] : memref<8x1xf32, #tpu.memory_space<vmem>>, vector<8x1xf32>
      tpu.vector_store %arg8[%c0_16, %c0_17], %23 {strides = array<i32>} : memref<8x1xf32, #tpu.memory_space<vmem>>, vector<8x1xf32>,
      %cst_18 = arith.constant 0.000000e+00 : f32
      %25 = vector.broadcast %cst_18 : f32 to vector<8x1xf32>
      %c0_19 = arith.constant 0 : index
      %c0_20 = arith.constant 0 : index
      %26 = vector.load %arg9[%c0_19, %c0_20] : memref<8x1xf32, #tpu.memory_space<vmem>>, vector<8x1xf32>
      tpu.vector_store %arg9[%c0_19, %c0_20], %25 {strides = array<i32>} : memref<8x1xf32, #tpu.memory_space<vmem>>, vector<8x1xf32>,
    } else {
    }
    %c0 = arith.constant 0 : index
    %c0_2 = arith.constant 0 : index
    %c0_3 = arith.constant 0 : index
    %5 = vector.load %arg3[%c0, %c0_2, %c0_3] : memref<1x8x16xf32, #tpu.memory_space<vmem>>, vector<1x8x16xf32>
    %6 = vector.shape_cast %5 : vector<1x8x16xf32> to vector<8x16xf32>
    %c0_4 = arith.constant 0 : index
    %c0_5 = arith.constant 0 : index
    %7 = vector.load %arg8[%c0_4, %c0_5] : memref<8x1xf32, #tpu.memory_space<vmem>>, vector<8x1xf32>
    %cst = arith.constant dense<0.000000e+00> : vector<8xf32>
    %8 = vector.multi_reduction <add>, %6, %cst [1] : vector<8x16xf32> to vector<8xf32>
    %9 = vector.shape_cast %8 : vector<8xf32> to vector<8x1xf32>
    %10 = arith.addf %7, %9 : vector<8x1xf32>
    %c0_6 = arith.constant 0 : index
    %c0_7 = arith.constant 0 : index
    %11 = vector.load %arg8[%c0_6, %c0_7] : memref<8x1xf32, #tpu.memory_space<vmem>>, vector<8x1xf32>
    tpu.vector_store %arg8[%c0_6, %c0_7], %10 {strides = array<i32>} : memref<8x1xf32, #tpu.memory_space<vmem>>, vector<8x1xf32>,
    %c0_8 = arith.constant 0 : index
    %c0_9 = arith.constant 0 : index
    %12 = vector.load %arg9[%c0_8, %c0_9] : memref<8x1xf32, #tpu.memory_space<vmem>>, vector<8x1xf32>
    %13 = arith.mulf %6, %6 : vector<8x16xf32>
    %cst_10 = arith.constant dense<0.000000e+00> : vector<8xf32>
    %14 = vector.multi_reduction <add>, %13, %cst_10 [1] : vector<8x16xf32> to vector<8xf32>
    %15 = vector.shape_cast %14 : vector<8xf32> to vector<8x1xf32>
    %16 = arith.addf %12, %15 : vector<8x1xf32>
    %c0_11 = arith.constant 0 : index
    %c0_12 = arith.constant 0 : index
    %17 = vector.load %arg9[%c0_11, %c0_12] : memref<8x1xf32, #tpu.memory_space<vmem>>, vector<8x1xf32>
    tpu.vector_store %arg9[%c0_11, %c0_12], %16 {strides = array<i32>} : memref<8x1xf32, #tpu.memory_space<vmem>>, vector<8x1xf32>,
    %c1_i32 = arith.constant 1 : i32
    %18 = arith.cmpi eq, %arg1, %c1_i32 : i32
    %c0_i32_13 = arith.constant 0 : i32
    %19 = arith.cmpi eq, %arg2, %c0_i32_13 : i32
    %20 = arith.andi %18, %19 : i1
    %21 = arith.extui %20 : i1 to i32
    %c0_i32_14 = arith.constant 0 : i32
    %22 = arith.cmpi ne, %21, %c0_i32_14 : i32
    scf.if %22 {
      %c0_15 = arith.constant 0 : index
      %c0_16 = arith.constant 0 : index
      %23 = vector.load %arg8[%c0_15, %c0_16] : memref<8x1xf32, #tpu.memory_space<vmem>>, vector<8x1xf32>
      %cst_17 = arith.constant 3.125000e-02 : f32
      %24 = vector.broadcast %cst_17 : f32 to vector<8x1xf32>
      %25 = arith.mulf %23, %24 : vector<8x1xf32>
      %c0_18 = arith.constant 0 : index
      %c0_19 = arith.constant 0 : index
      %26 = vector.load %arg9[%c0_18, %c0_19] : memref<8x1xf32, #tpu.memory_space<vmem>>, vector<8x1xf32>
      %cst_20 = arith.constant 3.125000e-02 : f32
      %27 = vector.broadcast %cst_20 : f32 to vector<8x1xf32>
      %28 = arith.mulf %26, %27 : vector<8x1xf32>
      %29 = arith.mulf %25, %25 : vector<8x1xf32>
      %30 = arith.subf %28, %29 : vector<8x1xf32>
      %cst_21 = arith.constant 9.99999974E-6 : f32
      %31 = vector.broadcast %cst_21 : f32 to vector<8x1xf32>
      %32 = arith.addf %30, %31 : vector<8x1xf32>
      %33 = math.rsqrt %32 : vector<8x1xf32>
      %c0_22 = arith.constant 0 : index
      %c0_23 = arith.constant 0 : index
      %34 = vector.load %arg4[%c0_22, %c0_23] : memref<8x1xf32, #tpu.memory_space<vmem>>, vector<8x1xf32>
      %35 = arith.mulf %34, %33 : vector<8x1xf32>
      %c0_24 = arith.constant 0 : index
      %c0_25 = arith.constant 0 : index
      %c0_26 = arith.constant 0 : index
      %36 = vector.load %arg6[%c0_24, %c0_25, %c0_26] : memref<1x8x1xf32, #tpu.memory_space<vmem>>, vector<1x8x1xf32>
      %37 = vector.shape_cast %36 : vector<1x8x1xf32> to vector<8x1xf32>
      %38 = vector.shape_cast %35 : vector<8x1xf32> to vector<1x8x1xf32>
      tpu.vector_store %arg6[%c0_24, %c0_25, %c0_26], %38 {strides = array<i32>} : memref<1x8x1xf32, #tpu.memory_space<vmem>>, vector<1x8x1xf32>,
      %c0_27 = arith.constant 0 : index
      %c0_28 = arith.constant 0 : index
      %39 = vector.load %arg5[%c0_27, %c0_28] : memref<8x1xf32, #tpu.memory_space<vmem>>, vector<8x1xf32>
      %40 = arith.mulf %25, %35 : vector<8x1xf32>
      %41 = arith.subf %39, %40 : vector<8x1xf32>
      %c0_29 = arith.constant 0 : index
      %c0_30 = arith.constant 0 : index
      %c0_31 = arith.constant 0 : index
      %42 = vector.load %arg7[%c0_29, %c0_30, %c0_31] : memref<1x8x1xf32, #tpu.memory_space<vmem>>, vector<1x8x1xf32>
      %43 = vector.shape_cast %42 : vector<1x8x1xf32> to vector<8x1xf32>
      %44 = vector.shape_cast %41 : vector<8x1xf32> to vector<1x8x1xf32>
      tpu.vector_store %arg7[%c0_29, %c0_30, %c0_31], %44 {strides = array<i32>} : memref<1x8x1xf32, #tpu.memory_space<vmem>>, vector<1x8x1xf32>,
    } else {
    }
    return
  }
  func.func @transform_0(%arg0: i32, %arg1: i32, %arg2: i32) -> (i32, i32, i32) {
    %c0_i32 = arith.constant 0 : i32
    return %arg1, %arg0, %arg2 : i32, i32, i32
  }
  func.func @transform_1(%arg0: i32, %arg1: i32, %arg2: i32) -> (i32, i32) {
    %c0_i32 = arith.constant 0 : i32
    %c0_i32_0 = arith.constant 0 : i32
    return %arg0, %c0_i32 : i32, i32
  }
  func.func @transform_2(%arg0: i32, %arg1: i32, %arg2: i32) -> (i32, i32) {
    %c0_i32 = arith.constant 0 : i32
    %c0_i32_0 = arith.constant 0 : i32
    return %arg0, %c0_i32 : i32, i32
  }
  func.func @transform_3(%arg0: i32, %arg1: i32, %arg2: i32) -> (i32, i32, i32) {
    %c0_i32 = arith.constant 0 : i32
    %c0_i32_0 = arith.constant 0 : i32
    %c0_i32_1 = arith.constant 0 : i32
    return %c0_i32, %arg0, %c0_i32_0 : i32, i32, i32
  }
  func.func @transform_4(%arg0: i32, %arg1: i32, %arg2: i32) -> (i32, i32, i32) {
    %c0_i32 = arith.constant 0 : i32
    %c0_i32_0 = arith.constant 0 : i32
    %c0_i32_1 = arith.constant 0 : i32
    return %c0_i32, %arg0, %c0_i32_0 : i32, i32, i32
  }
}

</mosaic_0001>

<llo_original>
// kernel: tpu_custom_call.1
$region0: #{tpu_custom_call.1}
  #allocation0 [shape = 'u32[]', space=smem, size = 0x4, offset = 0x4, fixed_abs, tag = 'smem constant byte address 0x4 - core index']
  #allocation1 [shape = 'u32[144,128]{1,0:T(1,128)}', space=vmem, size = 0x12000, scoped, tag = 'internal scratch']
  #allocation2 [shape = 'f32[8,1]{1,0:T(8,128)}', space=vmem, size = 0x1000, scoped, tag = 'scratch operand']
  #allocation3 [shape = 'f32[8,1]{1,0:T(8,128)}', space=vmem, size = 0x1000, scoped, tag = 'scratch operand']
  %s0 = inlined_call_operand.vmem [shape: f32[2,8,16], index: 0, kind: input, shape index: {}]
  %s1 = inlined_call_operand.vmem [shape: f32[8,1], index: 1, kind: input, shape index: {}]
  %s2 = inlined_call_operand.vmem [shape: f32[8,1], index: 2, kind: input, shape index: {}]
  %s3 = inlined_call_operand.vmem [shape: f32[1,8,1], index: 3, kind: output, shape index: {0}]
  %s4 = inlined_call_operand.vmem [shape: f32[1,8,1], index: 4, kind: output, shape index: {1}]
  %5 = xla_tuple %s3, %s4
  %s6 = sld [smem:[#allocation0]]
  $region61: #{tpu_custom_call.1} parent=0
    _
  %s8 = ssub.s32 1, %s6
  %s9 = scalar_select 0, %s8, %s6
  loop: start=0, step=1, limit=4
  $region2: #{tpu_custom_call.1} parent=0 // loop_pre_header
    _
  $region3: #{tpu_custom_call.1} parent=0 // loop_header
    %s11 = sphi 0, %s15
    %p12 = scmp.ge.s32.totalorder %s11, 4
    %s18 = sphi 0, %s37
    %s19 = sphi 0, %s33
    %s20 = sphi 0, %s29
    %s21 = sphi 0, %s18
    %s22 = sphi 0, %s19
    %s23 = sphi 0, %s20
    %s24 = sphi 0, %s21
    %s25 = sphi 0, %s22
    %s26 = sphi 0, %s23
    %s44 = sphi 0, %s46
    %s47 = sphi 0, %s44
    %s48 = sphi 0, %s47
    %s64 = sphi 0, %s48
    %s70 = sphi 0, %s72
    %s73 = sphi 0, %s70
    %s74 = sphi 0, %s73
    %s90 = sphi 0, %s74
    %s96 = sphi 0, %s98
    %s99 = sphi 0, %s96
    %s100 = sphi 0, %s99
    %s116 = sphi 0, %s100
    %s122 = sphi 0, %s124
    %s125 = sphi 0, %s122
    %s126 = sphi 0, %s125
    %s142 = sphi 0, %s126
    %s148 = sphi 0, %s150
    %s151 = sphi 0, %s148
    %s152 = sphi 0, %s151
    %s168 = sphi 0, %s152
  $region4: #{tpu_custom_call.1} parent=0 // loop_header_branch
    %14 = sbr.rel (%p12) target = $region8
  $region5: #{tpu_custom_call.1} parent=0 // loop_body
    %s16 = ssub.s32 %s11, 1
    %s17 = ssub.s32 %s11, 2
    %s27 = sadd.s32 1, %s20
    %p28 = scmp.ge.s32.totalorder %s27, 1
    %s29 = scalar_select %p28, 0, %s27
    %s30 = sadd.s32 1, %s19
    %s31 = scalar_select %p28, %s30, %s19
    %p32 = scmp.ge.s32.totalorder %s31, 2
    %s33 = scalar_select %p32, 0, %s31
    %s34 = sadd.s32 1, %s18
    %s35 = scalar_select %p32, %s34, %s18
    %p36 = scmp.ge.s32.totalorder %s35, 1
    %s37 = scalar_select %p36, 0, %s35
    %s38 = ssub.s32 %s19, %s33
    %s39 = ssub.s32 %s18, %s37
    %s40 = sor.u32 %s38, %s39
    %s41 = ssub.s32 %s20, %s29
    %s42 = sor.u32 %s40, %s41
    %p43 = scmp.eq.s32.totalorder %s42, 0
    %s45 = sadd.s32 %s44, 1
    %s46 = scalar_select %p43, %s44, %s45
    %p49 = pneg %p43
    %p50 = scmp.eq.s32.totalorder %s11, 1
    %p51 = por %p49, %p50
    %p52 = scmp.ne.s32.totalorder %s44, %s47
    %p53 = scmp.eq.s32.totalorder %s11, 0
    %p54 = por %p52, %p53
    %p55 = scmp.ne.s32.totalorder %s44, %s47
    %p56 = scmp.eq.s32.totalorder %s16, 1
    %p57 = por %p55, %p56
    %p58 = scmp.ne.s32.totalorder %s47, %s48
    %p59 = scmp.eq.s32.totalorder %s16, 0
    %p60 = por %p58, %p59
    %p61 = scmp.ne.s32.totalorder %s47, %s48
    %p62 = scmp.eq.s32.totalorder %s17, 1
    %p63 = por %p61, %p62
    %p65 = scmp.ne.s32.totalorder %s48, %s64
    %p66 = scmp.eq.s32.totalorder %s17, 0
    %p67 = por %p65, %p66
    %s68 = ssub.s32 %s18, %s37
    %p69 = scmp.eq.s32.totalorder %s68, 0
    %s71 = sadd.s32 %s70, 1
    %s72 = scalar_select %p69, %s70, %s71
    %p75 = pneg %p69
    %p76 = scmp.eq.s32.totalorder %s11, 1
    %p77 = por %p75, %p76
    %p78 = scmp.ne.s32.totalorder %s70, %s73
    %p79 = scmp.eq.s32.totalorder %s11, 0
    %p80 = por %p78, %p79
    %p81 = scmp.ne.s32.totalorder %s70, %s73
    %p82 = scmp.eq.s32.totalorder %s16, 1
    %p83 = por %p81, %p82
    %p84 = scmp.ne.s32.totalorder %s73, %s74
    %p85 = scmp.eq.s32.totalorder %s16, 0
    %p86 = por %p84, %p85
    %p87 = scmp.ne.s32.totalorder %s73, %s74
    %p88 = scmp.eq.s32.totalorder %s17, 1
    %p89 = por %p87, %p88
    %p91 = scmp.ne.s32.totalorder %s74, %s90
    %p92 = scmp.eq.s32.totalorder %s17, 0
    %p93 = por %p91, %p92
    %s94 = ssub.s32 %s18, %s37
    %p95 = scmp.eq.s32.totalorder %s94, 0
    %s97 = sadd.s32 %s96, 1
    %s98 = scalar_select %p95, %s96, %s97
    %p101 = pneg %p95
    %p102 = scmp.eq.s32.totalorder %s11, 1
    %p103 = por %p101, %p102
    %p104 = scmp.ne.s32.totalorder %s96, %s99
    %p105 = scmp.eq.s32.totalorder %s11, 0
    %p106 = por %p104, %p105
    %p107 = scmp.ne.s32.totalorder %s96, %s99
    %p108 = scmp.eq.s32.totalorder %s16, 1
    %p109 = por %p107, %p108
    %p110 = scmp.ne.s32.totalorder %s99, %s100
    %p111 = scmp.eq.s32.totalorder %s16, 0
    %p112 = por %p110, %p111
    %p113 = scmp.ne.s32.totalorder %s99, %s100
    %p114 = scmp.eq.s32.totalorder %s17, 1
    %p115 = por %p113, %p114
    %p117 = scmp.ne.s32.totalorder %s100, %s116
    %p118 = scmp.eq.s32.totalorder %s17, 0
    %p119 = por %p117, %p118
    %s120 = ssub.s32 %s18, %s37
    %p121 = scmp.eq.s32.totalorder %s120, 0
    %s123 = sadd.s32 %s122, 1
    %s124 = scalar_select %p121, %s122, %s123
    %p127 = pneg %p121
    %p128 = scmp.eq.s32.totalorder %s11, 1
    %p129 = por %p127, %p128
    %p130 = scmp.ne.s32.totalorder %s122, %s125
    %p131 = scmp.eq.s32.totalorder %s11, 0
    %p132 = por %p130, %p131
    %p133 = scmp.ne.s32.totalorder %s122, %s125
    %p134 = scmp.eq.s32.totalorder %s16, 1
    %p135 = por %p133, %p134
    %p136 = scmp.ne.s32.totalorder %s125, %s126
    %p137 = scmp.eq.s32.totalorder %s16, 0
    %p138 = por %p136, %p137
    %p139 = scmp.ne.s32.totalorder %s125, %s126
    %p140 = scmp.eq.s32.totalorder %s17, 1
    %p141 = por %p139, %p140
    %p143 = scmp.ne.s32.totalorder %s126, %s142
    %p144 = scmp.eq.s32.totalorder %s17, 0
    %p145 = por %p143, %p144
    %s146 = ssub.s32 %s18, %s37
    %p147 = scmp.eq.s32.totalorder %s146, 0
    %s149 = sadd.s32 %s148, 1
    %s150 = scalar_select %p147, %s148, %s149
    %p153 = pneg %p147
    %p154 = scmp.eq.s32.totalorder %s11, 1
    %p155 = por %p153, %p154
    %p156 = scmp.ne.s32.totalorder %s148, %s151
    %p157 = scmp.eq.s32.totalorder %s11, 0
    %p158 = por %p156, %p157
    %p159 = scmp.ne.s32.totalorder %s148, %s151
    %p160 = scmp.eq.s32.totalorder %s16, 1
    %p161 = por %p159, %p160
    %p162 = scmp.ne.s32.totalorder %s151, %s152
    %p163 = scmp.eq.s32.totalorder %s16, 0
    %p164 = por %p162, %p163
    %p165 = scmp.ne.s32.totalorder %s151, %s152
    %p166 = scmp.eq.s32.totalorder %s17, 1
    %p167 = por %p165, %p166
    %p169 = scmp.ne.s32.totalorder %s152, %s168
    %p170 = scmp.eq.s32.totalorder %s17, 0
    %p171 = por %p169, %p170
    %p172 = scmp.le.s32.totalorder 1, %s11
    %p173 = scmp.lt.s32.totalorder %s11, 3
    %p174 = pnand %p172, %p173
    %p175 = pneg %p174
    // Predicated region
    $region9: #{tpu_custom_call.1} parent=5 // pred_check
      _
    $region10: #{tpu_custom_call.1} parent=5 // pred_check_branch
      %177 = sbr.rel (%p174) target = $region12
    $region11: #{tpu_custom_call.1} parent=5 // pred_region
      %s178 = ssub.s32 %s11, 1
      // Predicated region
      $region13: #{tpu_custom_call.1} parent=11 // pred_check
        %p179 = pneg %p86
      $region14: #{tpu_custom_call.1} parent=11 // pred_check_branch
        %181 = sbr.rel (%p179) target = $region16
      $region15: #{tpu_custom_call.1} parent=11 // pred_region
        %p182 = scmp.lt.s32.totalorder %s21, 0
        %s183 = scalar_select %p182, %s21, 0
        %s184 = smul.addr %s183, 8
        %s185 = scalar_lea.vmem %s1, %s184
      $region16: #{tpu_custom_call.1} parent=11 // pred_fallthru
        _
      // Predicated region
      $region17: #{tpu_custom_call.1} parent=11 // pred_check
        %p186 = pneg %p112
      $region18: #{tpu_custom_call.1} parent=11 // pred_check_branch
        %188 = sbr.rel (%p186) target = $region20
      $region19: #{tpu_custom_call.1} parent=11 // pred_region
        %p189 = scmp.lt.s32.totalorder %s21, 0
        %s190 = scalar_select %p189, %s21, 0
        %s191 = smul.addr %s190, 8
        %s192 = scalar_lea.vmem %s2, %s191
      $region20: #{tpu_custom_call.1} parent=11 // pred_fallthru
        _
    $region12: #{tpu_custom_call.1} parent=5 // pred_fallthru
      _
    %p193 = scmp.lt.s32.totalorder %s11, 2
    // Predicated region
    $region21: #{tpu_custom_call.1} parent=5 // pred_check
      %p194 = pneg %p193
    $region22: #{tpu_custom_call.1} parent=5 // pred_check_branch
      %196 = sbr.rel (%p194) target = $region24
    $region23: #{tpu_custom_call.1} parent=5 // pred_region
      // Predicated region
      $region25: #{tpu_custom_call.1} parent=23 // pred_check
        %p197 = pneg %p54
      $region26: #{tpu_custom_call.1} parent=23 // pred_check_branch
        %199 = sbr.rel (%p197) target = $region28
      $region27: #{tpu_custom_call.1} parent=23 // pred_region
        %p200 = scmp.lt.s32.totalorder %s19, 1
        %s201 = scalar_select %p200, %s19, 1
        %p202 = scmp.lt.s32.totalorder %s18, 0
        %s203 = scalar_select %p202, %s18, 0
        %p204 = scmp.lt.s32.totalorder %s20, 0
        %s205 = scalar_select %p204, %s20, 0
        %s206 = sadd.s32 %s205, %s203
        %s207 = sadd.s32 %s206, %s201
        %s208 = smul.addr %s207, 8
        %s209 = scalar_lea.vmem %s0, %s208
      $region28: #{tpu_custom_call.1} parent=23 // pred_fallthru
        _
    $region24: #{tpu_custom_call.1} parent=5 // pred_fallthru
      _
    %p210 = scmp.le.s32.totalorder 1, %s11
    %p211 = scmp.lt.s32.totalorder %s11, 3
    %p212 = pnand %p210, %p211
    %p213 = pneg %p212
    // Predicated region
    $region29: #{tpu_custom_call.1} parent=5 // pred_check
      _
    $region30: #{tpu_custom_call.1} parent=5 // pred_check_branch
      %215 = sbr.rel (%p212) target = $region32
    $region31: #{tpu_custom_call.1} parent=5 // pred_region
      %s216 = ssub.s32 %s11, 1
      %p217 = scmp.lt.s32.totalorder %s22, 1
      %s218 = scalar_select %p217, %s22, 1
      %p219 = scmp.lt.s32.totalorder %s21, 0
      %s220 = scalar_select %p219, %s21, 0
      %p221 = scmp.lt.s32.totalorder %s23, 0
      %s222 = scalar_select %p221, %s23, 0
      %s223 = sadd.s32 %s222, %s220
      %s224 = sadd.s32 %s223, %s218
      %s225 = smul.addr %s224, 8
      %s226 = scalar_lea.vmem %s0, %s225
      %p227 = pneg %p60
      %p228 = pneg %p57
      %p229 = scmp.lt.s32.totalorder %s21, 0
      %s230 = scalar_select %p229, %s21, 0
      %s231 = smul.addr %s230, 8
      %s232 = scalar_lea.vmem %s1, %s231
      %p233 = pneg %p86
      %p234 = pneg %p83
      %p235 = scmp.lt.s32.totalorder %s21, 0
      %s236 = scalar_select %p235, %s21, 0
      %s237 = smul.addr %s236, 8
      %s238 = scalar_lea.vmem %s2, %s237
      %p239 = pneg %p112
      %p240 = pneg %p109
      %p241 = pneg %p138
      %p242 = pneg %p135
      %p243 = scmp.lt.s32.totalorder %s21, 0
      %s244 = scalar_select %p243, %s21, 0
      %s245 = smul.addr %s244, 8
      %s246 = scalar_lea.vmem %s3, %s245
      %p247 = pneg %p164
      %p248 = pneg %p161
      %p249 = scmp.lt.s32.totalorder %s21, 0
      %s250 = scalar_select %p249, %s21, 0
      %s251 = smul.addr %s250, 8
      %s252 = scalar_lea.vmem %s4, %s251
      %p253 = scmp.lt.s32.totalorder %s22, 1
      %s254 = scalar_select %p253, %s22, 1
      %p255 = scmp.lt.s32.totalorder %s21, 0
      %s256 = scalar_select %p255, %s21, 0
      %p257 = scmp.lt.s32.totalorder %s23, 0
      %s258 = scalar_select %p257, %s23, 0
      %s259 = sadd.s32 %s258, %s256
      %s260 = sadd.s32 %s259, %s254
      %s261 = smul.addr %s260, 8
      %s262 = scalar_lea.vmem %s0, %s261
      %p263 = scmp.lt.s32.totalorder %s21, 0
      %s264 = scalar_select %p263, %s21, 0
      %s265 = smul.addr %s264, 8
      %s266 = scalar_lea.vmem %s1, %s265
      %p267 = scmp.lt.s32.totalorder %s21, 0
      %s268 = scalar_select %p267, %s21, 0
      %s269 = smul.addr %s268, 8
      %s270 = scalar_lea.vmem %s2, %s269
      %p271 = scmp.lt.s32.totalorder %s21, 0
      %s272 = scalar_select %p271, %s21, 0
      %s273 = smul.addr %s272, 8
      %s274 = scalar_lea.vmem %s3, %s273
      %p275 = scmp.lt.s32.totalorder %s21, 0
      %s276 = scalar_select %p275, %s21, 0
      %s277 = smul.addr %s276, 8
      %s278 = scalar_lea.vmem %s4, %s277
      %p279 = scmp.eq.s32.totalorder %s22, 0
      %p280 = scmp.eq.s32.totalorder %s23, 0
      %p281 = pnand %p279, %p280
      %p282 = pneg %p281
      // Predicated region
      $region33: #{tpu_custom_call.1} parent=31 // pred_check
        _
      $region34: #{tpu_custom_call.1} parent=31 // pred_check_branch
        %284 = sbr.rel (%p281) target = $region36
      $region35: #{tpu_custom_call.1} parent=31 // pred_region
        %vm285 = vcmask 7168
        %286 = vst.msk [vmem:[#allocation2] sm:$0xff] %vm285, 0.0
        %287 = vst.msk [vmem:[#allocation3] sm:$0xff] %vm285, 0.0
      $region36: #{tpu_custom_call.1} parent=31 // pred_fallthru
        _
      %v288 = vld [vmem:[%s262] sm:$0xff]
      %v289 = vld [vmem:[#allocation2] sm:$0xff]
      %vm290 = vcmask 130048
      %v291 = vsel %vm290, %v288, 0.0
      %292 = vadd.xlane.f32.xlu0 %v291
      %v293 = vpop.xlane.xlu0 %292
      %v294 = vadd.f32 %v289, %v293
      %vm295 = vcmask 7168
      %296 = vst.msk [vmem:[#allocation2] sm:$0xff] %vm295, %v294
      %v297 = vld [vmem:[#allocation3] sm:$0xff]
      %v298 = vmul.f32 %v288, %v288
      %v299 = vsel %vm290, %v298, 0.0
      %300 = vadd.xlane.f32.xlu0 %v299
      %v301 = vpop.xlane.xlu0 %300
      %v302 = vadd.f32 %v297, %v301
      %303 = vst.msk [vmem:[#allocation3] sm:$0xff] %vm295, %v302
      %p304 = scmp.eq.s32.totalorder %s22, 1
      %p305 = pnand %p304, %p280
      %p306 = pneg %p305
      // Predicated region
      $region37: #{tpu_custom_call.1} parent=31 // pred_check
        _
      $region38: #{tpu_custom_call.1} parent=31 // pred_check_branch
        %308 = sbr.rel (%p305) target = $region40
      $region39: #{tpu_custom_call.1} parent=31 // pred_region
        %v309 = vld [vmem:[#allocation2] sm:$0xff]
        %v310 = vmul.f32 %v309, 0.03125
        %v311 = vld [vmem:[#allocation3] sm:$0xff]
        %v312 = vmul.f32 %v311, 0.03125
        %v313 = vmul.f32 %v310, %v310
        %v314 = vsub.f32 %v312, %v313
        %v315 = vadd.f32 %v314, 1e-05
        %v316 = vrsqrt.pop %v315
        %v317 = vld [vmem:[%s266] sm:$0xff]
        %v318 = vmul.f32 %v317, %v316
        %319 = vst.msk [vmem:[%s274] sm:$0xff] %vm295, %v318
        %v320 = vld [vmem:[%s270] sm:$0xff]
        %v321 = vmul.f32 %v310, %v318
        %v322 = vsub.f32 %v320, %v321
        %323 = vst.msk [vmem:[%s278] sm:$0xff] %vm295, %v322
      $region40: #{tpu_custom_call.1} parent=31 // pred_fallthru
        _
      %p324 = scmp.lt.s32.totalorder %s21, 0
      %s325 = scalar_select %p324, %s21, 0
      %s326 = smul.addr %s325, 8
      %s327 = scalar_lea.vmem %s3, %s326
      %p328 = scmp.lt.s32.totalorder %s21, 0
      %s329 = scalar_select %p328, %s21, 0
      %s330 = smul.addr %s329, 8
      %s331 = scalar_lea.vmem %s4, %s330
      // Predicated region
      $region41: #{tpu_custom_call.1} parent=31 // pred_check
        %p332 = pneg %p135
      $region42: #{tpu_custom_call.1} parent=31 // pred_check_branch
        %334 = sbr.rel (%p332) target = $region44
      $region43: #{tpu_custom_call.1} parent=31 // pred_region
        _
      $region44: #{tpu_custom_call.1} parent=31 // pred_fallthru
        _
      // Predicated region
      $region45: #{tpu_custom_call.1} parent=31 // pred_check
        %p335 = pneg %p161
      $region46: #{tpu_custom_call.1} parent=31 // pred_check_branch
        %337 = sbr.rel (%p335) target = $region48
      $region47: #{tpu_custom_call.1} parent=31 // pred_region
        _
      $region48: #{tpu_custom_call.1} parent=31 // pred_fallthru
        _
      // Predicated region
      $region49: #{tpu_custom_call.1} parent=31 // pred_check
        %p338 = pneg %p135
      $region50: #{tpu_custom_call.1} parent=31 // pred_check_branch
        %340 = sbr.rel (%p338) target = $region52
      $region51: #{tpu_custom_call.1} parent=31 // pred_region
        %p341 = scmp.lt.s32.totalorder %s21, 0
        %s342 = scalar_select %p341, %s21, 0
        %s343 = smul.addr %s342, 8
        %s344 = scalar_lea.vmem %s3, %s343
      $region52: #{tpu_custom_call.1} parent=31 // pred_fallthru
        _
      // Predicated region
      $region53: #{tpu_custom_call.1} parent=31 // pred_check
        %p345 = pneg %p161
      $region54: #{tpu_custom_call.1} parent=31 // pred_check_branch
        %347 = sbr.rel (%p345) target = $region56
      $region55: #{tpu_custom_call.1} parent=31 // pred_region
        %p348 = scmp.lt.s32.totalorder %s21, 0
        %s349 = scalar_select %p348, %s21, 0
        %s350 = smul.addr %s349, 8
        %s351 = scalar_lea.vmem %s4, %s350
      $region56: #{tpu_custom_call.1} parent=31 // pred_fallthru
        _
    $region32: #{tpu_custom_call.1} parent=5 // pred_fallthru
      _
    %p352 = scmp.le.s32.totalorder 2, %s11
    // Predicated region
    $region57: #{tpu_custom_call.1} parent=5 // pred_check
      %p353 = pneg %p352
    $region58: #{tpu_custom_call.1} parent=5 // pred_check_branch
      %355 = sbr.rel (%p353) target = $region60
    $region59: #{tpu_custom_call.1} parent=5 // pred_region
      %s356 = ssub.s32 %s11, 2
    $region60: #{tpu_custom_call.1} parent=5 // pred_fallthru
      _
  $region6: #{tpu_custom_call.1} parent=0 // loop_footer
    %s15 = sadd.s32 1, %s11
  $region7: #{tpu_custom_call.1} parent=0 // loop_footer_branch
    %10 = sbr.rel target = $region3
  $region8: #{tpu_custom_call.1} parent=0 // loop_exit
    _

</llo_original>
